<compile_context>
chip_gen: v7x
topology: tpu7x:2x2x1
jax: 0.10.0
libtpu: 0.0.40
codegen_flags: <defaults>
</compile_context>

<pallas_src>
import math
from functools import partial

import jax
import jax.numpy as jnp
from jax import lax
from jax.experimental import pallas as pl
from jax.experimental.pallas import tpu as pltpu

F32 = jnp.float32
BF16 = jnp.bfloat16


# ------------------------------ tuning helpers --------------------------------

_VMEM_LIMIT = None


def _vmem_limit_bytes():
    """Generation-aware scoped-VMEM limit: ~3/4 of physical capacity
    (≈48 MiB on v7x, ≈96 MiB on v5e/v6e); conservative fallback otherwise."""
    global _VMEM_LIMIT
    if _VMEM_LIMIT is None:
        limit = 56 * 1024 * 1024
        try:
            cap = getattr(pltpu.get_tpu_info(), "vmem_capacity_bytes", None)
            if cap:
                limit = int(cap) * 3 // 4
        except Exception:
            pass
        _VMEM_LIMIT = int(limit)
    return _VMEM_LIMIT


def _probe_buffered_support():
    """One tiny pallas_call to check pipeline_mode=pl.Buffered(1) is accepted."""
    try:
        def _copy(x_ref, o_ref):
            o_ref[...] = x_ref[...]

        fn = pl.pallas_call(
            _copy,
            out_shape=jax.ShapeDtypeStruct((8, 128), jnp.float32),
            grid=(2,),
            in_specs=[pl.BlockSpec((8, 128), lambda i: (0, 0),
                                   pipeline_mode=pl.Buffered(1))],
            out_specs=pl.BlockSpec((8, 128), lambda i: (0, 0)),
        )
        jax.block_until_ready(fn(jnp.zeros((8, 128), jnp.float32)))
        return True
    except Exception:
        return False


_BUFFERED_OK = None


def _weight_spec(block_shape, index_map):
    """BlockSpec for grid-invariant weights: single-buffered (Buffered(1)) when
    supported, since the block index never changes across the batch grid."""
    global _BUFFERED_OK
    if _BUFFERED_OK is None:
        _BUFFERED_OK = _probe_buffered_support()
    if _BUFFERED_OK:
        return pl.BlockSpec(block_shape, index_map, pipeline_mode=pl.Buffered(1))
    return pl.BlockSpec(block_shape, index_map)


def _pick_row_tile(n, cap):
    """Largest power-of-two-ish row tile (multiple of 8) dividing n, <= cap."""
    for t in (512, 256, 128, 64, 32, 16, 8):
        if t <= cap and t <= n and n % t == 0:
            return t
    return n


def _heads_per_group(n_heads, head_dim):
    """Largest divisor of n_heads whose packed width (g*d) reaches ~128 lanes,
    so q/k/v projection blocks are lane-dense on the MXU/VPU."""
    target = max(1, -(-128 // head_dim))        # ceil(128 / d)
    g = 1
    for cand in range(1, n_heads + 1):
        if n_heads % cand == 0 and cand <= target:
            g = cand
    return g


def _pick_vocab_tile(vocab, hidden):
    """MLM-head vocab tile: multiple of 128, big enough to amortize the
    ~0.35us/grid-step overhead, capped so double-buffered weight + output
    tiles stay inside the per-generation VMEM budget (v7x is the tight one)."""
    v128 = ((vocab + 127) // 128) * 128
    budget = _vmem_limit_bytes() // 2
    nominal_tm = 512
    bytes_per_col = hidden * 2 * 2 + nominal_tm * 4 * 2 + 8
    cap = max(128, (budget // bytes_per_col) // 128 * 128)
    return int(min(v128, cap, 8192))


# ----------------------------- in-kernel helpers -------------------------------

def _layernorm(x, g, b, eps=1e-5):
    # x: [R, H] f32, g/b: [1, H] f32  (PyTorch nn.LayerNorm default eps=1e-5)
    mu = jnp.mean(x, axis=-1, keepdims=True)
    d = x - mu
    var = jnp.mean(d * d, axis=-1, keepdims=True)
    return d * jax.lax.rsqrt(var + eps) * g + b


def _gelu_exact(x):
    # Exact (erf) GELU matching F.gelu(approximate='none').
    # erf via Abramowitz-Stegun 7.1.26 polynomial; the 1/(1+p*a) term goes to
    # the EUP through pl.reciprocal(approx=True).
    z = x * jnp.float32(0.7071067811865476)  # x / sqrt(2)
    a = jnp.abs(z)
    t = pl.reciprocal(1.0 + 0.3275911 * a, approx=True)
    poly = t * (0.254829592 + t * (-0.284496736 + t * (1.421413741
                + t * (-1.453152027 + t * 1.061405429))))
    erf_abs = 1.0 - poly * jnp.exp(-a * a)
    erf_z = jnp.sign(z) * erf_abs
    return 0.5 * x * (1.0 + erf_z)


# ---------------------------------- kernels -------------------------------------

def embed_ln_kernel(tok_ref, pos_ref, g_ref, b_ref, o_ref):
    # tok_ref: [1, TS, H] bf16, pos_ref: [TS, H] bf16, g/b: [1, H] f32
    x = tok_ref[0].astype(jnp.float32) + pos_ref[...].astype(jnp.float32)
    o_ref[0] = _layernorm(x, g_ref[...], b_ref[...]).astype(o_ref.dtype)


def transformer_layer_kernel(x_ref, bias_ref,
                             wq_ref, wk_ref, wv_ref, wo_ref,
                             ln1g_ref, ln1b_ref,
                             w1_ref, b1_ref, w2_ref, b2_ref,
                             ln2g_ref, ln2b_ref,
                             o_ref, ctx_ref, *, n_heads, ffn_row_tile):
    S = x_ref.shape[1]
    H = x_ref.shape[2]
    d = H // n_heads
    n_groups, _, pd = wq_ref.shape          # pd = heads_per_group * d (lane-dense)
    hpg = pd // d

    x = x_ref[0]                             # [S, H] f32 residual stream
    bias = bias_ref[0]                       # [1, S] additive key mask (0 / -1e9)

    # ------------- attention sub-layer (pre-norm residual) ---------------------
    h1 = _layernorm(x, ln1g_ref[...], ln1b_ref[...]).astype(BF16)

    # Head-group loop: lane-dense q/k/v projections (N = pd >= 128); each head's
    # context lands in its column block of the persistent [S, H] bf16 scratch so
    # the output projection below is a single K=H matmul (no per-head K=d dots).
    for g in range(n_groups):
        qp = jnp.dot(h1, wq_ref[g], preferred_element_type=jnp.float32)  # [S, pd]
        kp = jnp.dot(h1, wk_ref[g], preferred_element_type=jnp.float32)
        vp = jnp.dot(h1, wv_ref[g], preferred_element_type=jnp.float32)
        parts = []
        for i in range(hpg):
            q = qp[:, i * d:(i + 1) * d].astype(BF16)   # 1/sqrt(d) folded into wq
            k = kp[:, i * d:(i + 1) * d].astype(BF16)
            v = vp[:, i * d:(i + 1) * d].astype(BF16)
            s = jnp.einsum('nd,md->nm', q, k,
                           preferred_element_type=jnp.float32)           # [S, S]
            s = s + bias                                                  # pad keys -> -1e9
            s = s - jnp.max(s, axis=-1, keepdims=True)
            e = jnp.exp(s)
            p = e * pl.reciprocal(jnp.sum(e, axis=-1, keepdims=True), approx=True)
            parts.append(jnp.dot(p.astype(BF16), v,
                                 preferred_element_type=jnp.float32))     # [S, d]
        ctx_g = parts[0] if hpg == 1 else jnp.concatenate(parts, axis=-1)
        ctx_ref[:, g * pd:(g + 1) * pd] = ctx_g.astype(BF16)

    # Single full-K output projection: [S, H] bf16 x [H, H] bf16 -> [S, H] f32.
    attn = jnp.dot(ctx_ref[...], wo_ref[...], preferred_element_type=jnp.float32)
    o_ref[0] = (x + attn).astype(o_ref.dtype)

    # ------------- feed-forward sub-layer (pre-norm residual) ------------------
    # Row-tiled so the [rows, MLP] f32 GELU intermediate stays bounded in VMEM.
    ln2g = ln2g_ref[...]
    ln2b = ln2b_ref[...]
    b1 = b1_ref[...]
    b2 = b2_ref[...]
    o2d = o_ref.at[0]                        # [S, H] view holding x + attn
    n_chunks = S // ffn_row_tile

    @pl.loop(0, n_chunks)
    def _ffn_chunk(c):
        r0 = pl.multiple_of(c * ffn_row_tile, ffn_row_tile)
        xr = o2d[pl.ds(r0, ffn_row_tile), :]                              # f32 rows
        h2 = _layernorm(xr, ln2g, ln2b).astype(BF16)
        u = jnp.dot(h2, w1_ref[...], preferred_element_type=jnp.float32) + b1
        u = _gelu_exact(u).astype(BF16)
        y = jnp.dot(u, w2_ref[...], preferred_element_type=jnp.float32) + b2
        o2d[pl.ds(r0, ffn_row_tile), :] = (xr + y).astype(o_ref.dtype)


def mlm_head_kernel(x_ref, w_ref, b_ref, o_ref):
    # x_ref: [TM, H] bf16 (cast once in the wrapper), w_ref: [H, TV] bf16,
    # b_ref: [1, TV] f32, o_ref: [TM, TV] f32.
    logits = jnp.dot(x_ref[...], w_ref[...], preferred_element_type=jnp.float32)
    o_ref[...] = (logits + b_ref[...]).astype(o_ref.dtype)


# ------------------------------- pallas wrappers --------------------------------

def embed_layernorm(tok_emb, pos_emb, g, b):
    B, S, H = tok_emb.shape
    ts = _pick_row_tile(S, 512)
    return pl.pallas_call(
        embed_ln_kernel,
        out_shape=jax.ShapeDtypeStruct((B, S, H), jnp.float32),
        grid=(B, S // ts),
        in_specs=[
            pl.BlockSpec((1, ts, H), lambda i, j: (i, j, 0)),
            pl.BlockSpec((ts, H), lambda i, j: (j, 0)),
            pl.BlockSpec((1, H), lambda i, j: (0, 0)),
            pl.BlockSpec((1, H), lambda i, j: (0, 0)),
        ],
        out_specs=pl.BlockSpec((1, ts, H), lambda i, j: (i, j, 0)),
        compiler_params=pltpu.CompilerParams(
            dimension_semantics=("parallel", "parallel"),
            vmem_limit_bytes=_vmem_limit_bytes()),
    )(tok_emb, pos_emb, g, b)


def transformer_layer(x, attn_bias, lp, n_heads):
    B, S, H = x.shape
    MLP = lp["w1"].shape[1]
    n_groups, _, pd = lp["wq"].shape
    ffn_rt = _pick_row_tile(S, 256)
    kernel = partial(transformer_layer_kernel, n_heads=n_heads, ffn_row_tile=ffn_rt)
    ws = _weight_spec
    return pl.pallas_call(
        kernel,
        out_shape=jax.ShapeDtypeStruct((B, S, H), jnp.float32),
        grid=(B,),
        in_specs=[
            pl.BlockSpec((1, S, H), lambda i: (i, 0, 0)),      # x
            pl.BlockSpec((1, 1, S), lambda i: (i, 0, 0)),      # additive pad mask
            ws((n_groups, H, pd), lambda i: (0, 0, 0)),        # wq (grouped, scaled)
            ws((n_groups, H, pd), lambda i: (0, 0, 0)),        # wk
            ws((n_groups, H, pd), lambda i: (0, 0, 0)),        # wv
            ws((H, H), lambda i: (0, 0)),                      # wo (full)
            ws((1, H), lambda i: (0, 0)),                      # ln1 gamma
            ws((1, H), lambda i: (0, 0)),                      # ln1 beta
            ws((H, MLP), lambda i: (0, 0)),                    # w1
            ws((1, MLP), lambda i: (0, 0)),                    # b1
            ws((MLP, H), lambda i: (0, 0)),                    # w2
            ws((1, H), lambda i: (0, 0)),                      # b2
            ws((1, H), lambda i: (0, 0)),                      # ln2 gamma
            ws((1, H), lambda i: (0, 0)),                      # ln2 beta
        ],
        out_specs=pl.BlockSpec((1, S, H), lambda i: (i, 0, 0)),
        scratch_shapes=[pltpu.VMEM((S, H), BF16)],             # per-head ctx columns
        compiler_params=pltpu.CompilerParams(
            dimension_semantics=("parallel",),
            vmem_limit_bytes=_vmem_limit_bytes()),
    )(x, attn_bias, lp["wq"], lp["wk"], lp["wv"], lp["wo"],
      lp["ln1g"], lp["ln1b"], lp["w1"], lp["b1"], lp["w2"], lp["b2"],
      lp["ln2g"], lp["ln2b"])


def mlm_head(x_flat, w, b, tv):
    # x_flat: [M, H] bf16 (M = B*S), w: [H, Vp] bf16 (Vp multiple of tv).
    M, H = x_flat.shape
    Vp = w.shape[1]
    tm = _pick_row_tile(M, 512)
    return pl.pallas_call(
        mlm_head_kernel,
        out_shape=jax.ShapeDtypeStruct((M, Vp), jnp.float32),
        grid=(M // tm, Vp // tv),
        in_specs=[
            pl.BlockSpec((tm, H), lambda mi, vi: (mi, 0)),     # resident across vocab tiles
            pl.BlockSpec((H, tv), lambda mi, vi: (0, vi)),     # vocab tile streams
            pl.BlockSpec((1, tv), lambda mi, vi: (0, vi)),
        ],
        out_specs=pl.BlockSpec((tm, tv), lambda mi, vi: (mi, vi)),
        compiler_params=pltpu.CompilerParams(
            dimension_semantics=("parallel", "parallel"),
            vmem_limit_bytes=_vmem_limit_bytes()),
    )(x_flat, w, b)


# --------------------------------- model wrapper ---------------------------------

def init_params(key, vocab_size, max_len, pad_id, n_layers, hidden, mlp):
    """fp32 'PyTorch-equivalent' parameters (linear weights stored [in, out])."""
    scale = jnp.float32(0.02)
    keys = jax.random.split(key, 3 + n_layers)
    tok_table = jax.random.normal(keys[0], (vocab_size, hidden), jnp.float32) * scale
    tok_table = tok_table.at[pad_id].set(0.0)          # padding_idx row is zero
    pos_table = jax.random.normal(keys[1], (max_len, hidden), jnp.float32) * scale

    layers = []
    for l in range(n_layers):
        lk = jax.random.split(keys[2 + l], 4)
        layers.append(dict(
            wqkv=jax.random.normal(lk[0], (hidden, 3 * hidden), jnp.float32) * scale,
            wo=jax.random.normal(lk[1], (hidden, hidden), jnp.float32) * scale,
            ln1g=jnp.ones((1, hidden), jnp.float32),
            ln1b=jnp.zeros((1, hidden), jnp.float32),
            w1=jax.random.normal(lk[2], (hidden, mlp), jnp.float32) * scale,
            b1=jnp.zeros((1, mlp), jnp.float32),
            w2=jax.random.normal(lk[3], (mlp, hidden), jnp.float32) * scale,
            b2=jnp.zeros((1, hidden), jnp.float32),
            ln2g=jnp.ones((1, hidden), jnp.float32),
            ln2b=jnp.zeros((1, hidden), jnp.float32),
        ))

    mlm_w = jax.random.normal(keys[2 + n_layers], (hidden, vocab_size), jnp.float32) * scale
    mlm_b = jnp.zeros((1, vocab_size), jnp.float32)

    return dict(tok_table=tok_table, pos_table=pos_table,
                emb_g=jnp.ones((1, hidden), jnp.float32),
                emb_b=jnp.zeros((1, hidden), jnp.float32),
                layers=layers, mlm_w=mlm_w, mlm_b=mlm_b)


def prepare_params(p, n_heads):
    """One-time host-side conversion to the kernel layout:
       bf16 matmul weights, head-group-major (lane-dense) q/k/v projections with
       1/sqrt(d) folded into wq, full [H,H] output projection, vocab padded to
       the VMEM-budgeted MLM tile.  LayerNorm params and biases stay fp32."""
    H = p["tok_table"].shape[1]
    d = H // n_heads
    g = _heads_per_group(n_heads, d)
    n_groups = n_heads // g
    pd = g * d
    scale = 1.0 / math.sqrt(d)

    def pack(w):  # [H, n_heads*d] -> [n_groups, H, g*d], consecutive heads per group
        return w.reshape(H, n_groups, pd).transpose(1, 0, 2).astype(BF16)

    layers = []
    for lp in p["layers"]:
        wqkv = lp["wqkv"]                                   # [H, 3H]
        wq, wk, wv = wqkv[:, :H], wqkv[:, H:2 * H], wqkv[:, 2 * H:]
        layers.append(dict(
            wq=pack(wq * scale), wk=pack(wk), wv=pack(wv),
            wo=lp["wo"].astype(BF16),
            ln1g=lp["ln1g"], ln1b=lp["ln1b"],
            w1=lp["w1"].astype(BF16), b1=lp["b1"],
            w2=lp["w2"].astype(BF16), b2=lp["b2"],
            ln2g=lp["ln2g"], ln2b=lp["ln2b"],
        ))

    V = p["mlm_w"].shape[1]
    tv = _pick_vocab_tile(V, H)
    v_pad = -(-V // tv) * tv
    mlm_w = jnp.pad(p["mlm_w"], ((0, 0), (0, v_pad - V))).astype(BF16)
    mlm_b = jnp.pad(p["mlm_b"], ((0, 0), (0, v_pad - V)))

    return dict(
        tok_table=p["tok_table"].astype(BF16),   # bf16 tables halve gather bandwidth
        pos_table=p["pos_table"].astype(BF16),
        emb_g=p["emb_g"], emb_b=p["emb_b"],
        layers=layers,
        mlm_w=mlm_w, mlm_b=mlm_b,
        mlm_tv=tv, vocab_size=V, n_heads=n_heads)


def roberta_for_pretraining_forward(token_ids, kparams, *, pad_id):
    B, S = token_ids.shape
    H = kparams["tok_table"].shape[1]
    V = kparams["vocab_size"]

    # --- glue: embedding gathers + additive pad mask (data-dependent lookups) ---
    tok_emb = jnp.take(kparams["tok_table"], token_ids, axis=0)    # [B, S, H] bf16
    pos_emb = kparams["pos_table"][:S]                             # [S, H] bf16
    attn_bias = jnp.where(token_ids == pad_id,
                          jnp.float32(-1e9), jnp.float32(0.0)).reshape(B, 1, S)

    # --- Pallas hot path ---
    x = embed_layernorm(tok_emb, pos_emb, kparams["emb_g"], kparams["emb_b"])
    for lp in kparams["layers"]:
        x = transformer_layer(x, attn_bias, lp, kparams["n_heads"])

    # Cast once (halves MLM-head input DMA) and flatten (B,S) into the M dim.
    x_flat = x.reshape(B * S, H).astype(BF16)
    logits = mlm_head(x_flat, kparams["mlm_w"], kparams["mlm_b"], kparams["mlm_tv"])

    Vp = logits.shape[-1]
    logits = logits.reshape(B, S, Vp)
    if Vp != V:
        logits = logits[..., :V]
    return logits


# -------------------------------------- main --------------------------------------

if __name__ == "__main__":
    # Small RoBERTa config consistent with the module.
    VOCAB = 256
    MAX_LEN = 64
    PAD_ID = 0
    N_LAYERS = 2
    N_HEADS = 4
    HIDDEN = 128
    MLP = 256
    BATCH = 2
    SEQ = 16

    key = jax.random.PRNGKey(0)
    pkey, dkey = jax.random.split(key)
    params_f32 = init_params(pkey, VOCAB, MAX_LEN, PAD_ID, N_LAYERS, HIDDEN, MLP)
    kparams = prepare_params(params_f32, N_HEADS)

    # Deterministic token ids; make the last 3 tokens padding to exercise the mask.
    token_ids = jax.random.randint(dkey, (BATCH, SEQ), minval=1, maxval=VOCAB, dtype=jnp.int32)
    token_ids = token_ids.at[:, -3:].set(PAD_ID)

    logits = roberta_for_pretraining_forward(token_ids, kparams, pad_id=PAD_ID)
    logits = jax.block_until_ready(logits)

    assert logits.shape == (BATCH, SEQ, VOCAB), logits.shape
    assert bool(jnp.all(jnp.isfinite(logits)))
    print("KERNEL_OK")
</pallas_src>

<mosaic_0001>
module attributes {stable_mosaic.version = 11 : i64} {
  func.func @embed_ln_kernel(%arg0: i32, %arg1: i32, %arg2: memref<1x16x128xbf16, #tpu.memory_space<vmem>>, %arg3: memref<16x128xbf16, #tpu.memory_space<vmem>>, %arg4: memref<1x128xf32, #tpu.memory_space<vmem>>, %arg5: memref<1x128xf32, #tpu.memory_space<vmem>>, %arg6: memref<1x16x128xf32, #tpu.memory_space<vmem>>) attributes {dimension_semantics = [#tpu.dimension_semantics<parallel>, #tpu.dimension_semantics<parallel>], iteration_bounds = array<i64: 2, 1>, scalar_prefetch = 0 : i64, scratch_operands = 0 : i64, tpu.core_type = #tpu.core_type<tc>, window_params = [{transform_indices = @transform_0, window_bounds = array<i64: 1, 16, 128>}, {transform_indices = @transform_1, window_bounds = array<i64: 16, 128>}, {pipeline_mode = #tpu.pipeline_mode<synchronous>, transform_indices = @transform_2, window_bounds = array<i64: 1, 128>}, {pipeline_mode = #tpu.pipeline_mode<synchronous>, transform_indices = @transform_3, window_bounds = array<i64: 1, 128>}, {transform_indices = @transform_4, window_bounds = array<i64: 1, 16, 128>}]} {
    %c0 = arith.constant 0 : index
    %c0_0 = arith.constant 0 : index
    %c0_1 = arith.constant 0 : index
    %0 = vector.load %arg2[%c0, %c0_0, %c0_1] : memref<1x16x128xbf16, #tpu.memory_space<vmem>>, vector<1x16x128xbf16>
    %1 = vector.shape_cast %0 : vector<1x16x128xbf16> to vector<16x128xbf16>
    %2 = arith.extf %1 : vector<16x128xbf16> to vector<16x128xf32>
    %c0_2 = arith.constant 0 : index
    %c0_3 = arith.constant 0 : index
    %3 = vector.load %arg3[%c0_2, %c0_3] : memref<16x128xbf16, #tpu.memory_space<vmem>>, vector<16x128xbf16>
    %4 = arith.extf %3 : vector<16x128xbf16> to vector<16x128xf32>
    %5 = arith.addf %2, %4 : vector<16x128xf32>
    %c0_4 = arith.constant 0 : index
    %c0_5 = arith.constant 0 : index
    %6 = vector.load %arg4[%c0_4, %c0_5] : memref<1x128xf32, #tpu.memory_space<vmem>>, vector<1x128xf32>
    %c0_6 = arith.constant 0 : index
    %c0_7 = arith.constant 0 : index
    %7 = vector.load %arg5[%c0_6, %c0_7] : memref<1x128xf32, #tpu.memory_space<vmem>>, vector<1x128xf32>
    %cst = arith.constant dense<0.000000e+00> : vector<16xf32>
    %8 = vector.multi_reduction <add>, %5, %cst [1] : vector<16x128xf32> to vector<16xf32>
    %9 = vector.shape_cast %8 : vector<16xf32> to vector<16x1xf32>
    %cst_8 = arith.constant 1.280000e+02 : f32
    %10 = vector.broadcast %cst_8 : f32 to vector<16x1xf32>
    %11 = arith.divf %9, %10 : vector<16x1xf32>
    %12 = vector.broadcast %11 : vector<16x1xf32> to vector<16x128xf32>
    %13 = arith.subf %5, %12 : vector<16x128xf32>
    %14 = arith.mulf %13, %13 : vector<16x128xf32>
    %cst_9 = arith.constant dense<0.000000e+00> : vector<16xf32>
    %15 = vector.multi_reduction <add>, %14, %cst_9 [1] : vector<16x128xf32> to vector<16xf32>
    %16 = vector.shape_cast %15 : vector<16xf32> to vector<16x1xf32>
    %cst_10 = arith.constant 1.280000e+02 : f32
    %17 = vector.broadcast %cst_10 : f32 to vector<16x1xf32>
    %18 = arith.divf %16, %17 : vector<16x1xf32>
    %cst_11 = arith.constant 9.99999974E-6 : f32
    %19 = vector.broadcast %cst_11 : f32 to vector<16x1xf32>
    %20 = arith.addf %18, %19 : vector<16x1xf32>
    %21 = math.rsqrt %20 : vector<16x1xf32>
    %22 = vector.broadcast %21 : vector<16x1xf32> to vector<16x128xf32>
    %23 = arith.mulf %13, %22 : vector<16x128xf32>
    %24 = vector.broadcast %6 : vector<1x128xf32> to vector<16x128xf32>
    %25 = arith.mulf %23, %24 : vector<16x128xf32>
    %26 = vector.broadcast %7 : vector<1x128xf32> to vector<16x128xf32>
    %27 = arith.addf %25, %26 : vector<16x128xf32>
    %c0_12 = arith.constant 0 : index
    %c0_13 = arith.constant 0 : index
    %c0_14 = arith.constant 0 : index
    %28 = vector.load %arg6[%c0_12, %c0_13, %c0_14] : memref<1x16x128xf32, #tpu.memory_space<vmem>>, vector<1x16x128xf32>
    %29 = vector.shape_cast %28 : vector<1x16x128xf32> to vector<16x128xf32>
    %30 = vector.shape_cast %27 : vector<16x128xf32> to vector<1x16x128xf32>
    tpu.vector_store %arg6[%c0_12, %c0_13, %c0_14], %30 {strides = array<i32>} : memref<1x16x128xf32, #tpu.memory_space<vmem>>, vector<1x16x128xf32>,
    return
  }
  func.func @transform_0(%arg0: i32, %arg1: i32) -> (i32, i32, i32) {
    %c0_i32 = arith.constant 0 : i32
    %c0_i32_0 = arith.constant 0 : i32
    return %arg0, %arg1, %c0_i32 : i32, i32, i32
  }
  func.func @transform_1(%arg0: i32, %arg1: i32) -> (i32, i32) {
    %c0_i32 = arith.constant 0 : i32
    %c0_i32_0 = arith.constant 0 : i32
    return %arg1, %c0_i32 : i32, i32
  }
  func.func @transform_2(%arg0: i32, %arg1: i32) -> (i32, i32) {
    %c0_i32 = arith.constant 0 : i32
    %c0_i32_0 = arith.constant 0 : i32
    %c0_i32_1 = arith.constant 0 : i32
    return %c0_i32, %c0_i32_0 : i32, i32
  }
  func.func @transform_3(%arg0: i32, %arg1: i32) -> (i32, i32) {
    %c0_i32 = arith.constant 0 : i32
    %c0_i32_0 = arith.constant 0 : i32
    %c0_i32_1 = arith.constant 0 : i32
    return %c0_i32, %c0_i32_0 : i32, i32
  }
  func.func @transform_4(%arg0: i32, %arg1: i32) -> (i32, i32, i32) {
    %c0_i32 = arith.constant 0 : i32
    %c0_i32_0 = arith.constant 0 : i32
    return %arg0, %arg1, %c0_i32 : i32, i32, i32
  }
}

</mosaic_0001>

<llo_original>
// kernel: tpu_custom_call.1
$region0: #{tpu_custom_call.1}
  #allocation0 [shape = 'u32[]', space=smem, size = 0x4, offset = 0x4, fixed_abs, tag = 'smem constant byte address 0x4 - core index']
  #allocation1 [shape = 'u32[144,128]{1,0:T(1,128)}', space=vmem, size = 0x12000, scoped, tag = 'internal scratch']
  %s0 = inlined_call_operand.hbm [shape: bf16[2,16,128], index: 0, kind: input, shape index: {}]
  %s1 = inlined_call_operand.hbm [shape: bf16[16,128], index: 1, kind: input, shape index: {}]
  %s2 = inlined_call_operand.vmem [shape: f32[1,128], index: 2, kind: input, shape index: {}]
  %s3 = inlined_call_operand.vmem [shape: f32[1,128], index: 3, kind: input, shape index: {}]
  %s4 = inlined_call_operand.hbm [shape: f32[2,16,128], index: 4, kind: output, shape index: {}]
  %s5 = sld [smem:[#allocation0]]
  $region57: #{tpu_custom_call.1} parent=0
    _
  %s7 = ssub.s32 1, %s5
  %s8 = scalar_select 0, %s7, %s5
  $region1: #{tpu_custom_call.1} parent=0
    #allocation2 [shape = 'u8[8192]{0}', space=vmem, size = 0x2000, scoped, tag = 'input window, operand 0']
    #allocation3 [shape = 's32[2]{0}', space=sflag, size = 0x8, scoped, tag = 'scoped memory for tpu_custom_call.1']
    #allocation4 [shape = 's32[2]{0}', space=sflag, size = 0x8, scoped, tag = 'scoped memory for tpu_custom_call.1']
    #allocation5 [shape = 'u8[4096]{0}', space=vmem, size = 0x1000, scoped, tag = 'input window, operand 1, single buffered']
    #allocation6 [shape = 's32[1]{0}', space=sflag, size = 0x4, scoped, tag = 'scoped memory for tpu_custom_call.1']
    #allocation7 [shape = 'u8[16384]{0}', space=vmem, size = 0x4000, scoped, tag = 'output window, operand 0']
    %9 = vsyncpa [#allocation3], 0
    %s10 = scalar_lea.sflag [#allocation3], 1
    %11 = vsyncpa %s10, 0
    %12 = vsyncpa [#allocation6], 0
    %13 = vsyncpa [#allocation4], 0
    %s14 = scalar_lea.sflag [#allocation4], 1
    %15 = vsyncpa %s14, 0
    loop: start=0, step=1, limit=4
    $region2: #{tpu_custom_call.1} parent=1 // loop_pre_header
      _
    $region3: #{tpu_custom_call.1} parent=1 // loop_header
      %s17 = sphi 0, %s21
      %p18 = scmp.ge.s32.totalorder %s17, 4
      %s24 = sphi 0, %s36
      %s25 = sphi 0, %s32
      %s26 = sphi 0, %s24
      %s27 = sphi 0, %s25
      %s28 = sphi 0, %s26
      %s29 = sphi 0, %s27
      %s41 = sphi 0, %s43
      %s44 = sphi 0, %s41
      %s45 = sphi 0, %s44
      %s61 = sphi 0, %s45
      %s67 = sphi 0, %s69
      %s70 = sphi 0, %s67
      %s71 = sphi 0, %s70
      %s87 = sphi 0, %s71
      %s91 = sphi 0, %s91
      %s93 = sphi 0, %s91
      %s94 = sphi 0, %s93
      %s108 = sphi 0, %s94
      %s112 = sphi 0, %s112
      %s114 = sphi 0, %s112
      %s115 = sphi 0, %s114
      %s129 = sphi 0, %s115
      %s137 = sphi 0, %s139
      %s140 = sphi 0, %s137
      %s141 = sphi 0, %s140
      %s157 = sphi 0, %s141
    $region4: #{tpu_custom_call.1} parent=1 // loop_header_branch
      %20 = sbr.rel (%p18) target = $region8
    $region5: #{tpu_custom_call.1} parent=1 // loop_body
      %s22 = ssub.s32 %s17, 1
      %s23 = ssub.s32 %s17, 2
      %s30 = sadd.s32 1, %s25
      %p31 = scmp.ge.s32.totalorder %s30, 1
      %s32 = scalar_select %p31, 0, %s30
      %s33 = sadd.s32 1, %s24
      %s34 = scalar_select %p31, %s33, %s24
      %p35 = scmp.ge.s32.totalorder %s34, 2
      %s36 = scalar_select %p35, 0, %s34
      %s37 = ssub.s32 %s24, %s36
      %s38 = ssub.s32 %s25, %s32
      %s39 = sor.u32 %s37, %s38
      %p40 = scmp.eq.s32.totalorder %s39, 0
      %s42 = sadd.s32 %s41, 1
      %s43 = scalar_select %p40, %s41, %s42
      %p46 = pneg %p40
      %p47 = scmp.eq.s32.totalorder %s17, 1
      %p48 = por %p46, %p47
      %p49 = scmp.ne.s32.totalorder %s41, %s44
      %p50 = scmp.eq.s32.totalorder %s17, 0
      %p51 = por %p49, %p50
      %p52 = scmp.ne.s32.totalorder %s41, %s44
      %p53 = scmp.eq.s32.totalorder %s22, 1
      %p54 = por %p52, %p53
      %p55 = scmp.ne.s32.totalorder %s44, %s45
      %p56 = scmp.eq.s32.totalorder %s22, 0
      %p57 = por %p55, %p56
      %p58 = scmp.ne.s32.totalorder %s44, %s45
      %p59 = scmp.eq.s32.totalorder %s23, 1
      %p60 = por %p58, %p59
      %p62 = scmp.ne.s32.totalorder %s45, %s61
      %p63 = scmp.eq.s32.totalorder %s23, 0
      %p64 = por %p62, %p63
      %s65 = ssub.s32 %s25, %s32
      %p66 = scmp.eq.s32.totalorder %s65, 0
      %s68 = sadd.s32 %s67, 1
      %s69 = scalar_select %p66, %s67, %s68
      %p72 = pneg %p66
      %p73 = scmp.eq.s32.totalorder %s17, 1
      %p74 = por %p72, %p73
      %p75 = scmp.ne.s32.totalorder %s67, %s70
      %p76 = scmp.eq.s32.totalorder %s17, 0
      %p77 = por %p75, %p76
      %p78 = scmp.ne.s32.totalorder %s67, %s70
      %p79 = scmp.eq.s32.totalorder %s22, 1
      %p80 = por %p78, %p79
      %p81 = scmp.ne.s32.totalorder %s70, %s71
      %p82 = scmp.eq.s32.totalorder %s22, 0
      %p83 = por %p81, %p82
      %p84 = scmp.ne.s32.totalorder %s70, %s71
      %p85 = scmp.eq.s32.totalorder %s23, 1
      %p86 = por %p84, %p85
      %p88 = scmp.ne.s32.totalorder %s71, %s87
      %p89 = scmp.eq.s32.totalorder %s23, 0
      %p90 = por %p88, %p89
      %s92 = sadd.s32 %s91, 1
      %p95 = scmp.eq.s32.totalorder %s17, 1
      %p96 = scmp.ne.s32.totalorder %s91, %s93
      %p97 = scmp.eq.s32.totalorder %s17, 0
      %p98 = por %p96, %p97
      %p99 = scmp.ne.s32.totalorder %s91, %s93
      %p100 = scmp.eq.s32.totalorder %s22, 1
      %p101 = por %p99, %p100
      %p102 = scmp.ne.s32.totalorder %s93, %s94
      %p103 = scmp.eq.s32.totalorder %s22, 0
      %p104 = por %p102, %p103
      %p105 = scmp.ne.s32.totalorder %s93, %s94
      %p106 = scmp.eq.s32.totalorder %s23, 1
      %p107 = por %p105, %p106
      %p109 = scmp.ne.s32.totalorder %s94, %s108
      %p110 = scmp.eq.s32.totalorder %s23, 0
      %p111 = por %p109, %p110
      %s113 = sadd.s32 %s112, 1
      %p116 = scmp.eq.s32.totalorder %s17, 1
      %p117 = scmp.ne.s32.totalorder %s112, %s114
      %p118 = scmp.eq.s32.totalorder %s17, 0
      %p119 = por %p117, %p118
      %p120 = scmp.ne.s32.totalorder %s112, %s114
      %p121 = scmp.eq.s32.totalorder %s22, 1
      %p122 = por %p120, %p121
      %p123 = scmp.ne.s32.totalorder %s114, %s115
      %p124 = scmp.eq.s32.totalorder %s22, 0
      %p125 = por %p123, %p124
      %p126 = scmp.ne.s32.totalorder %s114, %s115
      %p127 = scmp.eq.s32.totalorder %s23, 1
      %p128 = por %p126, %p127
      %p130 = scmp.ne.s32.totalorder %s115, %s129
      %p131 = scmp.eq.s32.totalorder %s23, 0
      %p132 = por %p130, %p131
      %s133 = ssub.s32 %s24, %s36
      %s134 = ssub.s32 %s25, %s32
      %s135 = sor.u32 %s133, %s134
      %p136 = scmp.eq.s32.totalorder %s135, 0
      %s138 = sadd.s32 %s137, 1
      %s139 = scalar_select %p136, %s137, %s138
      %p142 = pneg %p136
      %p143 = scmp.eq.s32.totalorder %s17, 1
      %p144 = por %p142, %p143
      %p145 = scmp.ne.s32.totalorder %s137, %s140
      %p146 = scmp.eq.s32.totalorder %s17, 0
      %p147 = por %p145, %p146
      %p148 = scmp.ne.s32.totalorder %s137, %s140
      %p149 = scmp.eq.s32.totalorder %s22, 1
      %p150 = por %p148, %p149
      %p151 = scmp.ne.s32.totalorder %s140, %s141
      %p152 = scmp.eq.s32.totalorder %s22, 0
      %p153 = por %p151, %p152
      %p154 = scmp.ne.s32.totalorder %s140, %s141
      %p155 = scmp.eq.s32.totalorder %s23, 1
      %p156 = por %p154, %p155
      %p158 = scmp.ne.s32.totalorder %s141, %s157
      %p159 = scmp.eq.s32.totalorder %s23, 0
      %p160 = por %p158, %p159
      %p161 = scmp.le.s32.totalorder 1, %s17
      %p162 = scmp.lt.s32.totalorder %s17, 3
      %p163 = pnand %p161, %p162
      %p164 = pneg %p163
      // Predicated region
      $region9: #{tpu_custom_call.1} parent=5 // pred_check
        _
      $region10: #{tpu_custom_call.1} parent=5 // pred_check_branch
        %166 = sbr.rel (%p163) target = $region12
      $region11: #{tpu_custom_call.1} parent=5 // pred_region
        %s167 = ssub.s32 %s17, 1
        // Predicated region
        $region13: #{tpu_custom_call.1} parent=11 // pred_check
          %p168 = pneg %p83
        $region14: #{tpu_custom_call.1} parent=11 // pred_check_branch
          %170 = sbr.rel (%p168) target = $region16
        $region15: #{tpu_custom_call.1} parent=11 // pred_region
          %s171 = smul.u32 2, %s27
          %s173 = ssub.s32 128, 128
          %174 = vsyncadd [#allocation6], %s173
          %s175 = smul.addr %s171, 64
          %s176 = scalar_lea.hbm %s1, %s175
          %s177 = sshll.u32 [#allocation5], 4
          %s178 = int_to_ptr.vmem [resolvable:$true] %s177
          %183 = dma.hbm_to_vmem [thread:$0]  %s176, 128, %s178, [#allocation6], 64, 64, 4
        $region16: #{tpu_custom_call.1} parent=11 // pred_fallthru
          _
        // Predicated region
        $region17: #{tpu_custom_call.1} parent=11 // pred_check
          %p184 = pneg %p104
        $region18: #{tpu_custom_call.1} parent=11 // pred_check_branch
          %186 = sbr.rel (%p184) target = $region20
        $region19: #{tpu_custom_call.1} parent=11 // pred_region
          _
        $region20: #{tpu_custom_call.1} parent=11 // pred_fallthru
          _
        // Predicated region
        $region21: #{tpu_custom_call.1} parent=11 // pred_check
          %p187 = pneg %p125
        $region22: #{tpu_custom_call.1} parent=11 // pred_check_branch
          %189 = sbr.rel (%p187) target = $region24
        $region23: #{tpu_custom_call.1} parent=11 // pred_region
          _
        $region24: #{tpu_custom_call.1} parent=11 // pred_fallthru
          _
      $region12: #{tpu_custom_call.1} parent=5 // pred_fallthru
        _
      %p190 = scmp.lt.s32.totalorder %s17, 2
      // Predicated region
      $region25: #{tpu_custom_call.1} parent=5 // pred_check
        %p191 = pneg %p190
      $region26: #{tpu_custom_call.1} parent=5 // pred_check_branch
        %193 = sbr.rel (%p191) target = $region28
      $region27: #{tpu_custom_call.1} parent=5 // pred_region
        // Predicated region
        $region29: #{tpu_custom_call.1} parent=27 // pred_check
          %p194 = pneg %p51
        $region30: #{tpu_custom_call.1} parent=27 // pred_check_branch
          %196 = sbr.rel (%p194) target = $region32
        $region31: #{tpu_custom_call.1} parent=27 // pred_region
          %s197 = sand.u32 %s41, 1
          %s198 = scalar_lea.sflag [#allocation3], %s197
          %s199 = sand.u32 %s41, 1
          %s200 = smul.addr %s199, 8
          %s201 = scalar_lea.vmem [#allocation2], %s200
          %s202 = smul.u32 2, %s25
          %s204 = ssub.s32 128, 128
          %205 = vsyncadd %s198, %s204
          %s206 = smul.addr %s24, 2
          %s207 = sadd.s32 %s202, %s206
          %s208 = smul.addr %s207, 64
          %s209 = scalar_lea.hbm %s0, %s208
          %s210 = sshll.u32 %s201, 4
          %s211 = int_to_ptr.vmem [resolvable:$true] %s210
          %216 = dma.hbm_to_vmem [thread:$0]  %s209, 128, %s211, %s198, 64, 64, 4
        $region32: #{tpu_custom_call.1} parent=27 // pred_fallthru
          _
      $region28: #{tpu_custom_call.1} parent=5 // pred_fallthru
        _
      %p217 = scmp.le.s32.totalorder 1, %s17
      %p218 = scmp.lt.s32.totalorder %s17, 3
      %p219 = pnand %p217, %p218
      %p220 = pneg %p219
      // Predicated region
      $region33: #{tpu_custom_call.1} parent=5 // pred_check
        _
      $region34: #{tpu_custom_call.1} parent=5 // pred_check_branch
        %222 = sbr.rel (%p219) target = $region36
      $region35: #{tpu_custom_call.1} parent=5 // pred_region
        %s223 = ssub.s32 %s17, 1
        %s224 = sand.u32 %s44, 1
        %s225 = scalar_lea.sflag [#allocation3], %s224
        %s226 = sand.u32 %s44, 1
        %s227 = smul.addr %s226, 8
        %s228 = scalar_lea.vmem [#allocation2], %s227
        // Predicated region
        $region37: #{tpu_custom_call.1} parent=35 // pred_check
          %p229 = pneg %p57
        $region38: #{tpu_custom_call.1} parent=35 // pred_check_branch
          %231 = sbr.rel (%p229) target = $region40
        $region39: #{tpu_custom_call.1} parent=35 // pred_region
          %232 = dma.done %s225, 128
        $region40: #{tpu_custom_call.1} parent=35 // pred_fallthru
          _
        // Predicated region
        $region41: #{tpu_custom_call.1} parent=35 // pred_check
          %p233 = pneg %p83
        $region42: #{tpu_custom_call.1} parent=35 // pred_check_branch
          %235 = sbr.rel (%p233) target = $region44
        $region43: #{tpu_custom_call.1} parent=35 // pred_region
          %236 = dma.done [#allocation6], 128
        $region44: #{tpu_custom_call.1} parent=35 // pred_fallthru
          _
        %s237 = sand.u32 %s44, 1
        %s238 = scalar_lea.sflag [#allocation3], %s237
        %s239 = sand.u32 %s44, 1
        %s240 = smul.addr %s239, 8
        %s241 = scalar_lea.vmem [#allocation2], %s240
        %p242 = pneg %p57
        %p243 = pneg %p54
        %p244 = pneg %p83
        %p245 = pneg %p80
        %p246 = pneg %p104
        %p247 = pneg %p101
        %p248 = pneg %p125
        %p249 = pneg %p122
        %p250 = pneg %p153
        %p251 = pneg %p150
        %s252 = sand.u32 %s140, 1
        %s253 = scalar_lea.sflag [#allocation4], %s252
        %s254 = sand.u32 %s140, 1
        %s255 = smul.addr %s254, 16
        %s256 = scalar_lea.vmem [#allocation7], %s255
        %s257 = smul.u32 2, %s27
        %s258 = smul.u32 2, %s27
        %s259 = smul.u32 2, %s27
        %v260 = vld [vmem:[%s228] sm:$0xf]
        %v261 = vld [vmem:[%s228 + $0x4] sm:$0xf]
        %v262 = vunpack.c.l.bf16 %v260
        %v263 = vunpack.c.l.bf16 %v261
        %v264 = vld [vmem:[#allocation5] sm:$0xf]
        %v265 = vld [vmem:[#allocation5 + $0x4] sm:$0xf]
        %v266 = vunpack.c.l.bf16 %v264
        %v267 = vunpack.c.l.bf16 %v265
        %v268 = vadd.f32 %v262, %v266
        %v269 = vadd.f32 %v263, %v267
        %v270 = vld [vmem:[%s2] sm:$0x1]
        %v271 = vld [vmem:[%s3] sm:$0x1]
        %272 = vadd.xlane.f32.xlu0 %v268
        %v273 = vpop.xlane.xlu0 %272
        %274 = vadd.xlane.f32.xlu0 %v269
        %v275 = vpop.xlane.xlu0 %274
        %v276 = vrcp.pop 128.0
        %v277 = vmul.f32 %v273, %v276
        %v278 = vmul.f32 %v275, %v276
        %v279 = vsub.f32 %v268, %v277
        %v280 = vsub.f32 %v269, %v278
        %v281 = vmul.f32 %v279, %v279
        %v282 = vmul.f32 %v280, %v280
        %283 = vadd.xlane.f32.xlu0 %v281
        %v284 = vpop.xlane.xlu0 %283
        %285 = vadd.xlane.f32.xlu0 %v282
        %v286 = vpop.xlane.xlu0 %285
        %v287 = vmul.f32 %v284, %v276
        %v288 = vmul.f32 %v286, %v276
        %v289 = vadd.f32 %v287, 1e-05
        %v290 = vadd.f32 %v288, 1e-05
        %v291 = vrsqrt.pop %v289
        %v292 = vrsqrt.pop %v290
        %v293 = vmul.f32 %v279, %v291
        %v294 = vmul.f32 %v280, %v292
        %v296 = vlaneseq
        %v297 = vshrl.u32 %v296, 7
        %v298 = vsub.s32 0, %v297
        %v299 = vrot.slane %v270, %v298
        %v301 = vmul.f32 %v293, %v299
        %v302 = vmul.f32 %v294, %v299
        %v304 = vlaneseq
        %v305 = vshrl.u32 %v304, 7
        %v306 = vsub.s32 0, %v305
        %v307 = vrot.slane %v271, %v306
        %v309 = vadd.f32 %v301, %v307
        %v310 = vadd.f32 %v302, %v307
        %311 = vst [vmem:[%s256] sm:$0xff] %v309
        %312 = vst [vmem:[%s256 + $0x8] sm:$0xff] %v310
        %s313 = sand.u32 %s140, 1
        %s314 = scalar_lea.sflag [#allocation4], %s313
        %s315 = sand.u32 %s140, 1
        %s316 = smul.addr %s315, 16
        %s317 = scalar_lea.vmem [#allocation7], %s316
        // Predicated region
        $region45: #{tpu_custom_call.1} parent=35 // pred_check
          %p318 = pneg %p150
        $region46: #{tpu_custom_call.1} parent=35 // pred_check_branch
          %320 = sbr.rel (%p318) target = $region48
        $region47: #{tpu_custom_call.1} parent=35 // pred_region
          %s321 = smul.u32 2, %s27
          %s323 = ssub.s32 256, 256
          %324 = vsyncadd %s314, %s323
          %s325 = smul.addr %s26, 2
          %s326 = sadd.s32 %s321, %s325
          %s327 = smul.addr %s326, 128
          %s328 = scalar_lea.hbm %s4, %s327
          %s329 = sshll.u32 %s317, 4
          %s330 = int_to_ptr.vmem [resolvable:$true] %s329
          %335 = dma.vmem_to_hbm [thread:$0]  %s330, 256, %s328, %s314, 128, 128, 8
        $region48: #{tpu_custom_call.1} parent=35 // pred_fallthru
          _
      $region36: #{tpu_custom_call.1} parent=5 // pred_fallthru
        _
      %p336 = scmp.le.s32.totalorder 2, %s17
      // Predicated region
      $region49: #{tpu_custom_call.1} parent=5 // pred_check
        %p337 = pneg %p336
      $region50: #{tpu_custom_call.1} parent=5 // pred_check_branch
        %339 = sbr.rel (%p337) target = $region52
      $region51: #{tpu_custom_call.1} parent=5 // pred_region
        %s340 = ssub.s32 %s17, 2
        // Predicated region
        $region53: #{tpu_custom_call.1} parent=51 // pred_check
          %p341 = pneg %p156
        $region54: #{tpu_custom_call.1} parent=51 // pred_check_branch
          %343 = sbr.rel (%p341) target = $region56
        $region55: #{tpu_custom_call.1} parent=51 // pred_region
          %s344 = sand.u32 %s141, 1
          %s345 = scalar_lea.sflag [#allocation4], %s344
          %s346 = sand.u32 %s141, 1
          %s347 = smul.addr %s346, 16
          %s348 = scalar_lea.vmem [#allocation7], %s347
          %349 = dma.done %s345, 256
        $region56: #{tpu_custom_call.1} parent=51 // pred_fallthru
          _
      $region52: #{tpu_custom_call.1} parent=5 // pred_fallthru
        _
    $region6: #{tpu_custom_call.1} parent=1 // loop_footer
      %s21 = sadd.s32 1, %s17
    $region7: #{tpu_custom_call.1} parent=1 // loop_footer_branch
      %16 = sbr.rel target = $region3
    $region8: #{tpu_custom_call.1} parent=1 // loop_exit
      _
    %350 = vsyncpa [#allocation3], 1
    %s351 = scalar_lea.sflag [#allocation3], 1
    %352 = vsyncpa %s351, 1
    %353 = vsyncpa [#allocation6], 1
    %354 = vsyncpa [#allocation4], 1
    %s355 = scalar_lea.sflag [#allocation4], 1
    %356 = vsyncpa %s355, 1

</llo_original>
